<compile_context>
chip_gen: v6e
topology: v6e:2x2x1
jax: 0.10.0
libtpu: 0.0.40
codegen_flags: <defaults>
</compile_context>

<pallas_src>
import functools

import jax
import jax.numpy as jnp
from jax import lax
from jax.experimental import pallas as pl
from jax.experimental.pallas import tpu as pltpu

GAMMA = 1.5
ALPHA = 0.25

LANES = 128
MAX_TILE_ROWS = 4096   # 2 MiB/input f32 tile


def _round_up(x, m):
    return ((x + m - 1) // m) * m


def _sublane_multiple(dtype):
    # Native packed tiling: f32 -> 8 sublanes, bf16/f16 -> 16, int8/fp8/bool -> 32.
    return max(8, 32 // max(1, jnp.dtype(dtype).itemsize))


def _num_tensorcores_per_device():
    """TensorCores reachable from one JAX device via a 'parallel' grid axis."""
    try:
        kind = jax.devices()[0].device_kind.lower()
    except Exception:
        return 1
    if any(s in kind for s in ("lite", "v5e", "v6e", "v6")):
        return 1                      # v5e / v6e: one TensorCore per chip
    if any(s in kind for s in ("v2", "v3", "v4", "v5")):
        return 2                      # megacore chips: two TCs behind one device
    # TODO(synk): on v7x switch the split axis to pltpu.CORE_PARALLEL (or pl.core_map
    # over a 2-TC mesh) and verify in a trace that both cores run; plain "parallel"
    # reportedly does not change codegen there.
    return 1


def _focal_elementwise(x, t, gamma, alpha):
    """Per-element focal-modulated BCE-with-logits (f32; 3 EUP transcendentals)."""
    e = jnp.exp(-jnp.abs(x))                         # single exp, reused below
    # BCEWithLogitsLoss (reduction='none'), numerically-stable form.
    bce = jnp.maximum(x, 0.0) - x * t + jnp.log1p(e)
    s = 1.0 / (1.0 + e)                              # sigmoid(|x|); exact divide
    # z = 1 - p_t computed directly (no pred_prob / p_t intermediates):
    #   x >= 0: z = t + s - 2*t*s ; x < 0: z = 1 - (t + s - 2*t*s)
    w = t + s * (1.0 - 2.0 * t)
    z = jnp.where(x >= 0.0, w, 1.0 - w)
    alpha_factor = (1.0 - alpha) + t * (2.0 * alpha - 1.0)
    if gamma == 1.5:                                 # default: avoid pow
        mod = z * jnp.sqrt(z)
    elif gamma == 2.0:
        mod = z * z
    elif gamma == 1.0:
        mod = z
    elif gamma == 0.0:
        mod = jnp.ones_like(z)
    else:
        mod = z ** gamma
    return bce * (alpha_factor * mod)


def _focal_sum_kernel(pred_ref, true_ref, out_ref, *, gamma, alpha, total,
                      tile_rows, tiles_per_split, tiles_total, needs_mask, has_dup):
    p = pl.program_id(0)                 # split axis ("parallel")
    i = pl.program_id(1)                 # reduction axis ("arbitrary")
    b = p * tiles_per_split + i          # linear block index (may exceed last)
    last = tiles_total - 1

    @pl.when(i == 0)
    def _():
        out_ref[...] = jnp.zeros_like(out_ref)

    def partial_sum(mask_tail):
        x = pred_ref[...].astype(jnp.float32)
        t = true_ref[...].astype(jnp.float32)
        loss = _focal_elementwise(x, t, gamma, alpha)
        if mask_tail:
            # Zero the ragged tail: Pallas edge blocks hold unspecified data past
            # the array end, and the wrapper's <=127-elem lane pad holds zeros.
            row_idx = lax.broadcasted_iota(jnp.int32, loss.shape, 0)
            lane_idx = lax.broadcasted_iota(jnp.int32, loss.shape, 1)
            elem_idx = (b * tile_rows + row_idx) * LANES + lane_idx
            loss = jnp.where(elem_idx < total, loss, 0.0)
        # Vreg-shaped accumulation: same-lane VPU adds only; the single cross-lane
        # reduce over the tiny output happens in the wrapper.
        return loss.reshape(tile_rows // 8, 8, LANES).sum(axis=0)[None]

    if needs_mask:
        # Only the final ragged block pays for the mask; blocks past the end
        # (uneven split) fall through both branches and are skipped.
        @pl.when(b < last)
        def _():
            out_ref[...] += partial_sum(False)

        @pl.when(b == last)
        def _():
            out_ref[...] += partial_sum(True)
    elif has_dup:
        @pl.when(b <= last)
        def _():
            out_ref[...] += partial_sum(False)
    else:
        out_ref[...] += partial_sum(False)


def _focal_elem_kernel(pred_ref, true_ref, out_ref, *, gamma, alpha):
    x = pred_ref[...].astype(jnp.float32)
    t = true_ref[...].astype(jnp.float32)
    out_ref[...] = _focal_elementwise(x, t, gamma, alpha).astype(out_ref.dtype)


def focal_loss(pred, true, gamma=GAMMA, alpha=ALPHA, reduction="mean",
               num_splits=None):
    assert pred.shape == true.shape
    total = pred.size
    out_dtype = pred.dtype

    # Lane-dense (rows, 128) view.  Free bitcast when total % 128 == 0; otherwise
    # only a <=127-element zero pad (masked in-kernel) — never padded to tile
    # multiples.
    rows = pl.cdiv(total, LANES)
    pred_flat = pred.reshape(-1)
    true_flat = true.reshape(-1)
    lane_pad = rows * LANES - total
    if lane_pad:
        pred_flat = jnp.pad(pred_flat, (0, lane_pad))
        true_flat = jnp.pad(true_flat, (0, lane_pad))
    pred2d = pred_flat.reshape(rows, LANES)
    true2d = true_flat.reshape(rows, LANES)

    mult = max(_sublane_multiple(pred.dtype), _sublane_multiple(true.dtype))

    if reduction == "none":
        tile_rows = min(MAX_TILE_ROWS, _round_up(rows, mult))
        n_tiles = pl.cdiv(rows, tile_rows)
        out2d = pl.pallas_call(
            functools.partial(_focal_elem_kernel, gamma=gamma, alpha=alpha),
            out_shape=jax.ShapeDtypeStruct((rows, LANES), out_dtype),
            grid_spec=pltpu.PrefetchScalarGridSpec(
                num_scalar_prefetch=0,
                grid=(n_tiles,),
                in_specs=[
                    pl.BlockSpec((tile_rows, LANES), lambda i: (i, 0)),
                    pl.BlockSpec((tile_rows, LANES), lambda i: (i, 0)),
                ],
                out_specs=pl.BlockSpec((tile_rows, LANES), lambda i: (i, 0)),
            ),
            compiler_params=pltpu.CompilerParams(
                dimension_semantics=("parallel",)),
        )(pred2d, true2d)
        flat = out2d.reshape(-1)
        if lane_pad:
            flat = flat[:total]        # only misaligned totals pay this tail slice
        return flat.reshape(pred.shape)

    if reduction not in ("mean", "sum"):
        raise ValueError(f"unknown reduction: {reduction}")

    if num_splits is None:
        num_splits = _num_tensorcores_per_device()
    num_splits = max(1, int(num_splits))

    tile_rows = min(MAX_TILE_ROWS, _round_up(pl.cdiv(rows, num_splits), mult))
    tiles_total = pl.cdiv(rows, tile_rows)
    num_splits = min(num_splits, tiles_total)
    tiles_per_split = pl.cdiv(tiles_total, num_splits)
    needs_mask = total != tiles_total * tile_rows * LANES
    has_dup = num_splits * tiles_per_split != tiles_total

    if has_dup:
        def in_map(p, i):
            return (jnp.minimum(p * tiles_per_split + i, tiles_total - 1), 0)
    else:
        def in_map(p, i):
            return (p * tiles_per_split + i, 0)

    kernel = functools.partial(
        _focal_sum_kernel, gamma=gamma, alpha=alpha, total=total,
        tile_rows=tile_rows, tiles_per_split=tiles_per_split,
        tiles_total=tiles_total, needs_mask=needs_mask, has_dup=has_dup)

    out = pl.pallas_call(
        kernel,
        out_shape=jax.ShapeDtypeStruct((num_splits, 8, LANES), jnp.float32),
        grid_spec=pltpu.PrefetchScalarGridSpec(
            num_scalar_prefetch=0,
            grid=(num_splits, tiles_per_split),
            in_specs=[
                pl.BlockSpec((tile_rows, LANES), in_map),
                pl.BlockSpec((tile_rows, LANES), in_map),
            ],
            out_specs=pl.BlockSpec((1, 8, LANES), lambda p, i: (p, 0, 0)),
        ),
        compiler_params=pltpu.CompilerParams(
            dimension_semantics=("parallel", "arbitrary")),
    )(pred2d, true2d)

    total_sum = jnp.sum(out)   # tiny final cross-lane reduce in the wrapper
    if reduction == "mean":
        return (total_sum / jnp.float32(total)).astype(out_dtype)
    return total_sum.astype(out_dtype)


def _reference_focal_map(pred, true, gamma=GAMMA, alpha=ALPHA):
    x = pred.astype(jnp.float32)
    t = true.astype(jnp.float32)
    bce = jnp.maximum(x, 0.0) - x * t + jnp.log1p(jnp.exp(-jnp.abs(x)))
    p = jax.nn.sigmoid(x)
    p_t = t * p + (1.0 - t) * (1.0 - p)
    af = t * alpha + (1.0 - t) * (1.0 - alpha)
    mf = (1.0 - p_t) ** gamma
    return bce * af * mf


if __name__ == "__main__":
    key = jax.random.PRNGKey(0)
    k1, k2, k3, k4 = jax.random.split(key, 4)

    # Case 1: NCHW detection-head-like shape (128-aligned: fully copy-free path).
    shape1 = (2, 4, 16, 16)
    pred1 = jax.random.normal(k1, shape1, dtype=jnp.float32)
    true1 = jax.random.bernoulli(k2, 0.3, shape1).astype(jnp.float32)

    mean_out = jax.block_until_ready(focal_loss(pred1, true1, reduction="mean"))
    sum_out = jax.block_until_ready(focal_loss(pred1, true1, reduction="sum"))
    none_out = jax.block_until_ready(focal_loss(pred1, true1, reduction="none"))

    ref_map1 = _reference_focal_map(pred1, true1)
    assert jnp.allclose(mean_out, jnp.mean(ref_map1), rtol=1e-5, atol=1e-6), (
        mean_out, jnp.mean(ref_map1))
    assert jnp.allclose(sum_out, jnp.sum(ref_map1), rtol=1e-5, atol=1e-5), (
        sum_out, jnp.sum(ref_map1))
    assert jnp.allclose(none_out, ref_map1, rtol=1e-5, atol=1e-6)

    # Case 2: total not divisible by 128 — exercises the ragged/masked last block.
    shape2 = (2, 3, 20, 20)
    pred2 = jax.random.normal(k3, shape2, dtype=jnp.float32)
    true2 = jax.random.bernoulli(k4, 0.3, shape2).astype(jnp.float32)

    ref_map2 = _reference_focal_map(pred2, true2)
    mean_out2 = jax.block_until_ready(focal_loss(pred2, true2, reduction="mean"))
    sum_out2 = jax.block_until_ready(focal_loss(pred2, true2, reduction="sum"))
    none_out2 = jax.block_until_ready(focal_loss(pred2, true2, reduction="none"))
    assert jnp.allclose(mean_out2, jnp.mean(ref_map2), rtol=1e-5, atol=1e-6), (
        mean_out2, jnp.mean(ref_map2))
    assert jnp.allclose(sum_out2, jnp.sum(ref_map2), rtol=1e-5, atol=1e-5), (
        sum_out2, jnp.sum(ref_map2))
    assert jnp.allclose(none_out2, ref_map2, rtol=1e-5, atol=1e-6)

    print("KERNEL_OK")
</pallas_src>

<mosaic_0001>
module attributes {stable_mosaic.version = 11 : i64} {
  func.func @_focal_sum_kernel(%arg0: i32, %arg1: i32, %arg2: memref<16x128xf32, #tpu.memory_space<vmem>>, %arg3: memref<16x128xf32, #tpu.memory_space<vmem>>, %arg4: memref<1x8x128xf32, #tpu.memory_space<vmem>>) attributes {dimension_semantics = [#tpu.dimension_semantics<parallel>, #tpu.dimension_semantics<arbitrary>], iteration_bounds = array<i64: 1, 1>, scalar_prefetch = 0 : i64, scratch_operands = 0 : i64, tpu.core_type = #tpu.core_type<tc>, window_params = [{transform_indices = @transform_0, window_bounds = array<i64: 16, 128>}, {transform_indices = @transform_1, window_bounds = array<i64: 16, 128>}, {transform_indices = @transform_2, window_bounds = array<i64: 1, 8, 128>}]} {
    %c0_i32 = arith.constant 0 : i32
    %0 = arith.cmpi eq, %arg1, %c0_i32 : i32
    %1 = arith.extui %0 : i1 to i32
    %c0_i32_0 = arith.constant 0 : i32
    %2 = arith.cmpi ne, %1, %c0_i32_0 : i32
    scf.if %2 {
      %cst_20 = arith.constant 0.000000e+00 : f32
      %44 = vector.broadcast %cst_20 : f32 to vector<1x8x128xf32>
      %c0_21 = arith.constant 0 : index
      %c0_22 = arith.constant 0 : index
      %c0_23 = arith.constant 0 : index
      %45 = vector.load %arg4[%c0_21, %c0_22, %c0_23] : memref<1x8x128xf32, #tpu.memory_space<vmem>>, vector<1x8x128xf32>
      tpu.vector_store %arg4[%c0_21, %c0_22, %c0_23], %44 {strides = array<i32>} : memref<1x8x128xf32, #tpu.memory_space<vmem>>, vector<1x8x128xf32>,
    } else {
    }
    %c0 = arith.constant 0 : index
    %c0_1 = arith.constant 0 : index
    %c0_2 = arith.constant 0 : index
    %3 = vector.load %arg4[%c0, %c0_1, %c0_2] : memref<1x8x128xf32, #tpu.memory_space<vmem>>, vector<1x8x128xf32>
    %c0_3 = arith.constant 0 : index
    %c0_4 = arith.constant 0 : index
    %4 = vector.load %arg2[%c0_3, %c0_4] : memref<16x128xf32, #tpu.memory_space<vmem>>, vector<16x128xf32>
    %c0_5 = arith.constant 0 : index
    %c0_6 = arith.constant 0 : index
    %5 = vector.load %arg3[%c0_5, %c0_6] : memref<16x128xf32, #tpu.memory_space<vmem>>, vector<16x128xf32>
    %6 = math.absf %4 : vector<16x128xf32>
    %cst = arith.constant 0.000000e+00 : f32
    %7 = vector.broadcast %cst : f32 to vector<16x128xf32>
    %8 = arith.subf %7, %6 : vector<16x128xf32>
    %9 = math.exp %8 : vector<16x128xf32>
    %cst_7 = arith.constant 0.000000e+00 : f32
    %10 = vector.broadcast %cst_7 : f32 to vector<16x128xf32>
    %11 = arith.maximumf %4, %10 : vector<16x128xf32>
    %12 = arith.mulf %4, %5 : vector<16x128xf32>
    %13 = arith.subf %11, %12 : vector<16x128xf32>
    %14 = math.log1p %9 : vector<16x128xf32>
    %15 = arith.addf %13, %14 : vector<16x128xf32>
    %cst_8 = arith.constant 1.000000e+00 : f32
    %16 = vector.broadcast %cst_8 : f32 to vector<16x128xf32>
    %17 = arith.addf %16, %9 : vector<16x128xf32>
    %cst_9 = arith.constant 1.000000e+00 : f32
    %18 = vector.broadcast %cst_9 : f32 to vector<16x128xf32>
    %19 = arith.divf %18, %17 : vector<16x128xf32>
    %cst_10 = arith.constant 2.000000e+00 : f32
    %20 = vector.broadcast %cst_10 : f32 to vector<16x128xf32>
    %21 = arith.mulf %20, %5 : vector<16x128xf32>
    %cst_11 = arith.constant 1.000000e+00 : f32
    %22 = vector.broadcast %cst_11 : f32 to vector<16x128xf32>
    %23 = arith.subf %22, %21 : vector<16x128xf32>
    %24 = arith.mulf %19, %23 : vector<16x128xf32>
    %25 = arith.addf %5, %24 : vector<16x128xf32>
    %cst_12 = arith.constant 0.000000e+00 : f32
    %26 = vector.broadcast %cst_12 : f32 to vector<16x128xf32>
    %27 = arith.cmpf oge, %4, %26 : vector<16x128xf32>
    %cst_13 = arith.constant 1.000000e+00 : f32
    %28 = vector.broadcast %cst_13 : f32 to vector<16x128xf32>
    %29 = arith.subf %28, %25 : vector<16x128xf32>
    %30 = arith.select %27, %25, %29 : vector<16x128xi1>, vector<16x128xf32>
    %cst_14 = arith.constant -5.000000e-01 : f32
    %31 = vector.broadcast %cst_14 : f32 to vector<16x128xf32>
    %32 = arith.mulf %5, %31 : vector<16x128xf32>
    %cst_15 = arith.constant 7.500000e-01 : f32
    %33 = vector.broadcast %cst_15 : f32 to vector<16x128xf32>
    %34 = arith.addf %33, %32 : vector<16x128xf32>
    %35 = math.sqrt %30 : vector<16x128xf32>
    %36 = arith.mulf %30, %35 : vector<16x128xf32>
    %37 = arith.mulf %34, %36 : vector<16x128xf32>
    %38 = arith.mulf %15, %37 : vector<16x128xf32>
    %39 = vector.shape_cast %38 : vector<16x128xf32> to vector<2x8x128xf32>
    %cst_16 = arith.constant dense<0.000000e+00> : vector<8x128xf32>
    %40 = vector.multi_reduction <add>, %39, %cst_16 [0] : vector<2x8x128xf32> to vector<8x128xf32>
    %41 = vector.shape_cast %40 : vector<8x128xf32> to vector<1x8x128xf32>
    %42 = arith.addf %3, %41 : vector<1x8x128xf32>
    %c0_17 = arith.constant 0 : index
    %c0_18 = arith.constant 0 : index
    %c0_19 = arith.constant 0 : index
    %43 = vector.load %arg4[%c0_17, %c0_18, %c0_19] : memref<1x8x128xf32, #tpu.memory_space<vmem>>, vector<1x8x128xf32>
    tpu.vector_store %arg4[%c0_17, %c0_18, %c0_19], %42 {strides = array<i32>} : memref<1x8x128xf32, #tpu.memory_space<vmem>>, vector<1x8x128xf32>,
    return
  }
  func.func @transform_0(%arg0: i32, %arg1: i32) -> (i32, i32) {
    %c1_i32 = arith.constant 1 : i32
    %0 = arith.muli %arg0, %c1_i32 : i32
    %1 = arith.addi %0, %arg1 : i32
    %c0_i32 = arith.constant 0 : i32
    %c0_i32_0 = arith.constant 0 : i32
    return %1, %c0_i32 : i32, i32
  }
  func.func @transform_1(%arg0: i32, %arg1: i32) -> (i32, i32) {
    %c1_i32 = arith.constant 1 : i32
    %0 = arith.muli %arg0, %c1_i32 : i32
    %1 = arith.addi %0, %arg1 : i32
    %c0_i32 = arith.constant 0 : i32
    %c0_i32_0 = arith.constant 0 : i32
    return %1, %c0_i32 : i32, i32
  }
  func.func @transform_2(%arg0: i32, %arg1: i32) -> (i32, i32, i32) {
    %c0_i32 = arith.constant 0 : i32
    %c0_i32_0 = arith.constant 0 : i32
    %c0_i32_1 = arith.constant 0 : i32
    return %arg0, %c0_i32, %c0_i32_0 : i32, i32, i32
  }
}

</mosaic_0001>

<llo_original>
// kernel: tpu_custom_call.1
$region0: #{tpu_custom_call.1}
  #allocation0 [shape = 'u32[]', space=smem, size = 0x4, offset = 0x4, fixed_abs, tag = 'smem constant byte address 0x4 - core index']
  #allocation1 [shape = 'u32[144,128]{1,0:T(1,128)}', space=vmem, size = 0x12000, scoped, tag = 'internal scratch']
  %s0 = inlined_call_operand.hbm [shape: f32[16,128], index: 0, kind: input, shape index: {}]
  %s1 = inlined_call_operand.hbm [shape: f32[16,128], index: 1, kind: input, shape index: {}]
  %s2 = inlined_call_operand.hbm [shape: f32[1,8,128], index: 2, kind: output, shape index: {}]
  %s3 = sld [smem:[#allocation0]]
  $region30: #{tpu_custom_call.1} parent=0
    _
  %s5 = ssub.s32 1, %s3
  %s6 = scalar_select 0, %s5, %s3
  $region1: #{tpu_custom_call.1} parent=0
    #allocation2 [shape = 'u8[8192]{0}', space=vmem, size = 0x2000, scoped, tag = 'input window, operand 0, single buffered']
    #allocation3 [shape = 's32[1]{0}', space=sflag, size = 0x4, scoped, tag = 'scoped memory for tpu_custom_call.1']
    #allocation4 [shape = 's32[1]{0}', space=sflag, size = 0x4, scoped, tag = 'scoped memory for tpu_custom_call.1']
    #allocation5 [shape = 'u8[8192]{0}', space=vmem, size = 0x2000, scoped, tag = 'input window, operand 1, single buffered']
    #allocation6 [shape = 's32[1]{0}', space=sflag, size = 0x4, scoped, tag = 'scoped memory for tpu_custom_call.1']
    #allocation7 [shape = 'u8[4096]{0}', space=vmem, size = 0x1000, scoped, tag = 'output window, operand 0, single buffered']
    %7 = vsyncpa [#allocation3], 0
    %8 = vsyncpa [#allocation6], 0
    %9 = vsyncpa [#allocation4], 0
    // Predicated region
    $region2: #{tpu_custom_call.1} parent=1 // pred_check
      _
    $region3: #{tpu_custom_call.1} parent=1 // pred_check_branch
      %11 = sbr.rel (0) target = $region5
    $region4: #{tpu_custom_call.1} parent=1 // pred_region
      %s12 = sadd.s32 0, 0
      %s13 = smul.u32 2, %s12
      %s15 = ssub.s32 256, 256
      %16 = vsyncadd [#allocation3], %s15
      %s17 = smul.addr %s13, 128
      %s18 = scalar_lea.hbm %s0, %s17
      %s19 = sshll.u32 [#allocation2], 4
      %s20 = int_to_ptr.vmem [resolvable:$true] %s19
      %25 = dma.hbm_to_vmem [thread:$0]  %s18, 256, %s20, [#allocation3], 128, 128, 8
    $region5: #{tpu_custom_call.1} parent=1 // pred_fallthru
      _
    // Predicated region
    $region6: #{tpu_custom_call.1} parent=1 // pred_check
      _
    $region7: #{tpu_custom_call.1} parent=1 // pred_check_branch
      %27 = sbr.rel (0) target = $region9
    $region8: #{tpu_custom_call.1} parent=1 // pred_region
      %s28 = sadd.s32 0, 0
      %s29 = smul.u32 2, %s28
      %s31 = ssub.s32 256, 256
      %32 = vsyncadd [#allocation6], %s31
      %s33 = smul.addr %s29, 128
      %s34 = scalar_lea.hbm %s1, %s33
      %s35 = sshll.u32 [#allocation5], 4
      %s36 = int_to_ptr.vmem [resolvable:$true] %s35
      %41 = dma.hbm_to_vmem [thread:$0]  %s34, 256, %s36, [#allocation6], 128, 128, 8
    $region9: #{tpu_custom_call.1} parent=1 // pred_fallthru
      _
    // Predicated region
    $region10: #{tpu_custom_call.1} parent=1 // pred_check
      _
    $region11: #{tpu_custom_call.1} parent=1 // pred_check_branch
      %43 = sbr.rel (0) target = $region13
    $region12: #{tpu_custom_call.1} parent=1 // pred_region
      %44 = dma.done [#allocation3], 256
    $region13: #{tpu_custom_call.1} parent=1 // pred_fallthru
      _
    // Predicated region
    $region14: #{tpu_custom_call.1} parent=1 // pred_check
      _
    $region15: #{tpu_custom_call.1} parent=1 // pred_check_branch
      %46 = sbr.rel (0) target = $region17
    $region16: #{tpu_custom_call.1} parent=1 // pred_region
      %47 = dma.done [#allocation6], 256
    $region17: #{tpu_custom_call.1} parent=1 // pred_fallthru
      _
    %s48 = sadd.s32 0, 0
    %s49 = smul.u32 2, %s48
    %s50 = sadd.s32 0, 0
    %s51 = smul.u32 2, %s50
    %p52 = scmp.eq.s32.totalorder 0, 0
    // Predicated region
    $region18: #{tpu_custom_call.1} parent=1 // pred_check
      %p53 = pneg %p52
    $region19: #{tpu_custom_call.1} parent=1 // pred_check_branch
      %55 = sbr.rel (%p53) target = $region21
    $region20: #{tpu_custom_call.1} parent=1 // pred_region
      %56 = vst [vmem:[#allocation7] sm:$0xff] 0.0
    $region21: #{tpu_custom_call.1} parent=1 // pred_fallthru
      _
    %v57 = vld [vmem:[#allocation7] sm:$0xff]
    %v58 = vld [vmem:[#allocation2] sm:$0xff]
    %v59 = vld [vmem:[#allocation2 + $0x8] sm:$0xff]
    %v60 = vld [vmem:[#allocation5] sm:$0xff]
    %v61 = vld [vmem:[#allocation5 + $0x8] sm:$0xff]
    %v62 = vand.u32 2147483647, %v58
    %v63 = vand.u32 2147483647, %v59
    %v64 = vsub.f32 0.0, %v62
    %v65 = vsub.f32 0.0, %v63
    %v66 = vmul.f32 %v64, 1.442695
    %v67 = vpow.pop %v66
    %v68 = vmul.f32 %v65, 1.442695
    %v69 = vpow.pop %v68
    %v70 = vmax.f32 %v58, 0.0
    %v71 = vmax.f32 %v59, 0.0
    %v72 = vmul.f32 %v58, %v60
    %v73 = vmul.f32 %v59, %v61
    %v74 = vsub.f32 %v70, %v72
    %v75 = vsub.f32 %v71, %v73
    %v76 = vadd.f32 %v67, 1.0
    %v77 = vlog2.pop %v76
    %v78 = vmul.f32 %v77, 0.6931472
    %v79 = vmul.f32 -0.5, %v67
    %v80 = vadd.f32 %v79, 1.0
    %v81 = vmul.f32 %v80, %v67
    %v82 = vand.u32 2147483647, %v67
    %vm83 = vcmp.lt.f32.partialorder %v82, 0.0004427343
    %v84 = vsel %vm83, %v81, %v78
    %v85 = vadd.f32 %v69, 1.0
    %v86 = vlog2.pop %v85
    %v87 = vmul.f32 %v86, 0.6931472
    %v88 = vmul.f32 -0.5, %v69
    %v89 = vadd.f32 %v88, 1.0
    %v90 = vmul.f32 %v89, %v69
    %v91 = vand.u32 2147483647, %v69
    %vm92 = vcmp.lt.f32.partialorder %v91, 0.0004427343
    %v93 = vsel %vm92, %v90, %v87
    %v94 = vadd.f32 %v74, %v84
    %v95 = vadd.f32 %v75, %v93
    %v96 = vadd.f32 %v67, 1.0
    %v97 = vadd.f32 %v69, 1.0
    %v98 = vrcp.pop %v96
    %v99 = vmul.f32 1.0, %v98
    %v100 = vrcp.pop %v97
    %v101 = vmul.f32 1.0, %v100
    %v102 = vmul.f32 %v60, 2.0
    %v103 = vmul.f32 %v61, 2.0
    %v104 = vsub.f32 1.0, %v102
    %v105 = vsub.f32 1.0, %v103
    %v106 = vmul.f32 %v99, %v104
    %v107 = vmul.f32 %v101, %v105
    %v108 = vadd.f32 %v60, %v106
    %v109 = vadd.f32 %v61, %v107
    %vm110 = vcmp.ge.f32.partialorder %v58, 0.0
    %vm111 = vcmp.ge.f32.partialorder %v59, 0.0
    %v112 = vsub.f32 1.0, %v108
    %v113 = vsub.f32 1.0, %v109
    %v114 = vsel %vm110, %v108, %v112
    %v115 = vsel %vm111, %v109, %v113
    %v116 = vmul.f32 %v60, -0.5
    %v117 = vmul.f32 %v61, -0.5
    %v118 = vadd.f32 %v116, 0.75
    %v119 = vadd.f32 %v117, 0.75
    %v120 = vrsqrt.pop %v114
    %v121 = vmul.f32 %v114, %v120
    %vm122 = vcmp.eq.f32.partialorder %v114, inf
    %v123 = vsel %vm122, %v114, %v121
    %vm124 = vcmp.eq.f32.partialorder %v114, 0.0
    %v125 = vand.u32 %v114, 2147483648
    %v126 = vsel %vm124, %v125, %v123
    %v127 = vrsqrt.pop %v115
    %v128 = vmul.f32 %v115, %v127
    %vm129 = vcmp.eq.f32.partialorder %v115, inf
    %v130 = vsel %vm129, %v115, %v128
    %vm131 = vcmp.eq.f32.partialorder %v115, 0.0
    %v132 = vand.u32 %v115, 2147483648
    %v133 = vsel %vm131, %v132, %v130
    %v134 = vmul.f32 %v114, %v126
    %v135 = vmul.f32 %v115, %v133
    %v136 = vmul.f32 %v118, %v134
    %v137 = vmul.f32 %v119, %v135
    %v138 = vmul.f32 %v94, %v136
    %v139 = vmul.f32 %v95, %v137
    %v140 = vadd.f32 %v138, %v139
    %v141 = vadd.f32 %v57, %v140
    %142 = vst [vmem:[#allocation7] sm:$0xff] %v141
    // Predicated region
    $region22: #{tpu_custom_call.1} parent=1 // pred_check
      _
    $region23: #{tpu_custom_call.1} parent=1 // pred_check_branch
      %144 = sbr.rel (0) target = $region25
    $region24: #{tpu_custom_call.1} parent=1 // pred_region
      %s146 = ssub.s32 128, 128
      %147 = vsyncadd [#allocation4], %s146
      %s149 = sshll.u32 [#allocation7], 4
      %s150 = int_to_ptr.vmem [resolvable:$true] %s149
      %152 = dma.vmem_to_hbm [thread:$0]  %s150, 128, %s2, [#allocation4]
    $region25: #{tpu_custom_call.1} parent=1 // pred_fallthru
      _
    // Predicated region
    $region26: #{tpu_custom_call.1} parent=1 // pred_check
      _
    $region27: #{tpu_custom_call.1} parent=1 // pred_check_branch
      %154 = sbr.rel (0) target = $region29
    $region28: #{tpu_custom_call.1} parent=1 // pred_region
      %155 = dma.done [#allocation4], 128
    $region29: #{tpu_custom_call.1} parent=1 // pred_fallthru
      _
    %156 = vsyncpa [#allocation3], 1
    %157 = vsyncpa [#allocation6], 1
    %158 = vsyncpa [#allocation4], 1

</llo_original>
